<compile_context>
chip_gen: v7x
topology: tpu7x:2x2x1
jax: 0.10.0
libtpu: 0.0.40
codegen_flags: <defaults>
</compile_context>

<pallas_src>
import jax
import jax.numpy as jnp
from jax.experimental import pallas as pl
from jax.experimental.pallas import tpu as pltpu


def _round_up(x, m):
    return ((x + m - 1) // m) * m


# ---------------------------------------------------------------------------
# Tiled matmul + bias:  out = x @ w_t + b      (bf16 operands, f32 accumulate)
# Grid = (N tiles, M tiles); M is the *inner* axis so each weight tile is
# DMA'd exactly once (weight-bandwidth is the dominant cost for the vocab
# projection). Both axes are "parallel".
# ---------------------------------------------------------------------------
def _matmul_bias_kernel(x_ref, w_ref, b_ref, o_ref):
    o_ref[...] = (jnp.dot(x_ref[...], w_ref[...],
                          preferred_element_type=jnp.float32)
                  + b_ref[...]).astype(o_ref.dtype)


def matmul_bias(x, w_t, b, *, out_dtype=jnp.float32, tm=256, tn=512):
    """x: (M0, K) bf16, w_t: (K, N0) bf16, b: (1, N0) f32 -> (M0, N0) out_dtype.

    K and N0 are expected to be multiples of 128 (caller pads); M0 a multiple
    of 8. Any residual M/N padding is done here and stripped afterwards.
    """
    M0, K = x.shape
    K2, N0 = w_t.shape
    assert K == K2 and K % 128 == 0 and N0 % 128 == 0

    tm_eff = M0 if (M0 <= 512 and M0 % 8 == 0) else tm
    tn_eff = N0 if N0 <= tn else tn
    M = _round_up(M0, tm_eff)
    N = _round_up(N0, tn_eff)
    if M != M0:
        x = jnp.pad(x, ((0, M - M0), (0, 0)))
    if N != N0:
        w_t = jnp.pad(w_t, ((0, 0), (0, N - N0)))
        b = jnp.pad(b, ((0, 0), (0, N - N0)))

    grid = (N // tn_eff, M // tm_eff)   # N outer, M inner -> weight tile reused
    out = pl.pallas_call(
        _matmul_bias_kernel,
        out_shape=jax.ShapeDtypeStruct((M, N), out_dtype),
        grid_spec=pltpu.PrefetchScalarGridSpec(
            num_scalar_prefetch=0,
            grid=grid,
            in_specs=[
                pl.BlockSpec((tm_eff, K), lambda j, i: (i, 0)),
                pl.BlockSpec((K, tn_eff), lambda j, i: (0, j)),
                pl.BlockSpec((1, tn_eff), lambda j, i: (0, j)),
            ],
            out_specs=pl.BlockSpec((tm_eff, tn_eff), lambda j, i: (i, j)),
        ),
        compiler_params=pltpu.CompilerParams(
            dimension_semantics=("parallel", "parallel")),
    )(x, w_t, b)
    if (M, N) != (M0, N0):
        out = out[:M0, :N0]
    return out


# ---------------------------------------------------------------------------
# LSTM recurrence: chunked grid over T (grid=(1,) for short sequences), with
# an in-kernel fori_loop over the timesteps of the chunk. gates_x (precomputed
# X @ W_ih^T + b, f32) is streamed per chunk, W_hh^T (bf16) is resident, h/c
# are carried in f32 VMEM scratch. h outputs are accumulated into the chunk's
# output block and written back to HBM once per chunk.
# ---------------------------------------------------------------------------
def _lstm_chunk_kernel(gx_ref, w_hh_t_ref, h_out_ref, h_scr, c_scr):
    @pl.when(pl.program_id(0) == 0)
    def _():
        h_scr[...] = jnp.zeros_like(h_scr)
        c_scr[...] = jnp.zeros_like(c_scr)

    H = h_scr.shape[1]
    TC = gx_ref.shape[0]
    w_hh = w_hh_t_ref[...]                       # (H_pad, 4*H_pad) bf16, hoisted

    def step(t, carry):
        h = h_scr[...]
        c = c_scr[...]
        # MXU in bf16, accumulate + gate math in f32 (v5e VPU/EUP are f32-only).
        gates = gx_ref[t] + jnp.dot(h.astype(jnp.bfloat16), w_hh,
                                    preferred_element_type=jnp.float32)
        # PyTorch gate order: input, forget, cell(g), output
        i_g = jax.nn.sigmoid(gates[:, 0 * H:1 * H])
        f_g = jax.nn.sigmoid(gates[:, 1 * H:2 * H])
        g_g = jnp.tanh(gates[:, 2 * H:3 * H])
        o_g = jax.nn.sigmoid(gates[:, 3 * H:4 * H])
        c_new = f_g * c + i_g * g_g
        h_new = o_g * jnp.tanh(c_new)
        h_scr[...] = h_new
        c_scr[...] = c_new
        h_out_ref[t] = h_new.astype(h_out_ref.dtype)
        return carry

    jax.lax.fori_loop(0, TC, step, None, unroll=(TC <= 32))


def lstm_recurrence(gates_x, w_hh_t, *, chunk):
    """gates_x: (T_pad, B_pad, 4H_pad) f32, w_hh_t: (H_pad, 4H_pad) bf16
       -> hidden states (T_pad, B_pad, H_pad) bf16."""
    T_pad, B_pad, G = gates_x.shape
    H_pad = w_hh_t.shape[0]
    assert T_pad % chunk == 0
    num_chunks = T_pad // chunk
    # TODO(synk): on v7x (2 TCs) add a leading "parallel" batch-tile grid axis
    # so the two cores split the batch; omitted here (B_pad is tiny).
    return pl.pallas_call(
        _lstm_chunk_kernel,
        out_shape=jax.ShapeDtypeStruct((T_pad, B_pad, H_pad), jnp.bfloat16),
        grid_spec=pltpu.PrefetchScalarGridSpec(
            num_scalar_prefetch=0,
            grid=(num_chunks,),
            in_specs=[
                pl.BlockSpec((chunk, B_pad, G), lambda c: (c, 0, 0)),
                pl.BlockSpec((H_pad, G), lambda c: (0, 0)),     # resident W_hh^T
            ],
            out_specs=pl.BlockSpec((chunk, B_pad, H_pad), lambda c: (c, 0, 0)),
            scratch_shapes=[pltpu.VMEM((B_pad, H_pad), jnp.float32),   # h carry
                            pltpu.VMEM((B_pad, H_pad), jnp.float32)],  # c carry
        ),
        compiler_params=pltpu.CompilerParams(
            dimension_semantics=("arbitrary",)),     # time loop is sequential
    )(gates_x, w_hh_t)


# ---------------------------------------------------------------------------
# Full forward pass.
# ---------------------------------------------------------------------------
def decoder_rnn_forward(features, captions, params):
    """features: (B, E) f32, captions: (B, Tc) int32 -> logits (B, Tc, V) f32."""
    B, E = features.shape
    T = captions.shape[1]
    V = params["word_embed"].shape[0]
    H = params["w_hh"].shape[1]

    # Padded sizes: sublane/lane aligned everywhere; V padded to the vocab tile.
    B_pad = _round_up(B, 8)
    E_pad = _round_up(E, 128)
    H_pad = _round_up(H, 128)
    V_pad = _round_up(V, 512)
    G = 4 * H_pad

    # ---- weight prep (pad per-gate, pre-transpose, bf16 for the MXU) --------
    def pad_gate_rows(w):                       # (4H, K) -> (4*H_pad, K)
        w4 = w.reshape(4, H, -1)
        w4 = jnp.pad(w4, ((0, 0), (0, H_pad - H), (0, 0)))
        return w4.reshape(4 * H_pad, -1)

    w_ih = pad_gate_rows(params["w_ih"].astype(jnp.float32))         # (G, E)
    w_ih = jnp.pad(w_ih, ((0, 0), (0, E_pad - E)))                   # (G, E_pad)
    w_ih_t = jnp.transpose(w_ih).astype(jnp.bfloat16)                # (E_pad, G)

    w_hh = pad_gate_rows(params["w_hh"].astype(jnp.float32))         # (G, H)
    w_hh = jnp.pad(w_hh, ((0, 0), (0, H_pad - H)))                   # (G, H_pad)
    w_hh_t = jnp.transpose(w_hh).astype(jnp.bfloat16)                # (H_pad, G)

    b_g = (params["b_ih"] + params["b_hh"]).astype(jnp.float32).reshape(4, H)
    b_g = jnp.pad(b_g, ((0, 0), (0, H_pad - H))).reshape(1, G)       # (1, G) f32

    w_out = jnp.pad(params["w_out"].astype(jnp.float32),
                    ((0, V_pad - V), (0, H_pad - H)))                # (V_pad, H_pad)
    w_out_t = jnp.transpose(w_out).astype(jnp.bfloat16)              # (H_pad, V_pad)
    b_out = jnp.pad(params["b_out"].astype(jnp.float32),
                    (0, V_pad - V)).reshape(1, V_pad)                # (1, V_pad)

    # ---- layout glue in plain JAX: embedding gather, concat, pad, time-major
    embeds = jnp.take(params["word_embed"], captions[:, :-1], axis=0)  # (B,T-1,E)
    inputs = jnp.concatenate(
        [features[:, None, :].astype(embeds.dtype), embeds], axis=1)   # (B, T, E)
    x = jnp.pad(inputs.astype(jnp.float32),
                ((0, B_pad - B), (0, 0), (0, E_pad - E)))              # (B_pad,T,E_pad)
    x_tm = jnp.transpose(x, (1, 0, 2)).astype(jnp.bfloat16)            # (T,B_pad,E_pad)

    # Chunk the time axis for the recurrence (single chunk for short T).
    TC = T if T <= 64 else 64
    T_pad = _round_up(T, TC)
    if T_pad != T:
        x_tm = jnp.pad(x_tm, ((0, T_pad - T), (0, 0), (0, 0)))

    # (1) Input projection for all timesteps as one MXU-efficient matmul.
    gx = matmul_bias(x_tm.reshape(T_pad * B_pad, E_pad), w_ih_t, b_g,
                     out_dtype=jnp.float32)                            # (T_pad*B_pad, G)
    gx = gx.reshape(T_pad, B_pad, G)

    # (2) Serial LSTM recurrence over time (chunked grid, in-kernel loop).
    h_all = lstm_recurrence(gx, w_hh_t, chunk=TC)                      # (T_pad,B_pad,H_pad) bf16

    # (3) Vocab projection on batch-major rows: only the small hidden tensor is
    #     transposed; the (B, T, V) logits come out already batch-major.
    h_bt = jnp.transpose(h_all[:T], (1, 0, 2))                         # (B_pad, T, H_pad)
    logits = matmul_bias(h_bt.reshape(B_pad * T, H_pad), w_out_t, b_out,
                         out_dtype=jnp.float32)                        # (B_pad*T, V_pad)
    logits = logits.reshape(B_pad, T, V_pad)
    return logits[:B, :, :V]                                           # (B, T, V)


# ---------------------------------------------------------------------------
# Pure-JAX f32 reference of the PyTorch forward (for correctness check).
# ---------------------------------------------------------------------------
def _reference_forward(features, captions, params):
    embeds = jnp.take(params["word_embed"], captions[:, :-1], axis=0)
    inputs = jnp.concatenate([features[:, None, :], embeds], axis=1)
    B, _T, _E = inputs.shape
    H = params["w_hh"].shape[1]
    w_ih_t = params["w_ih"].T
    w_hh_t = params["w_hh"].T
    b = params["b_ih"] + params["b_hh"]

    def step(carry, x_t):
        h, c = carry
        gates = x_t @ w_ih_t + h @ w_hh_t + b
        i_g = jax.nn.sigmoid(gates[:, 0 * H:1 * H])
        f_g = jax.nn.sigmoid(gates[:, 1 * H:2 * H])
        g_g = jnp.tanh(gates[:, 2 * H:3 * H])
        o_g = jax.nn.sigmoid(gates[:, 3 * H:4 * H])
        c_new = f_g * c + i_g * g_g
        h_new = o_g * jnp.tanh(c_new)
        return (h_new, c_new), h_new

    h0 = jnp.zeros((B, H), jnp.float32)
    c0 = jnp.zeros((B, H), jnp.float32)
    _, hs = jax.lax.scan(step, (h0, c0), jnp.transpose(inputs, (1, 0, 2)))
    lstm_out = jnp.transpose(hs, (1, 0, 2))                   # (B, T, H)
    return lstm_out @ params["w_out"].T + params["b_out"]


def init_params(key, embed_size, hidden_size, vocab_size):
    ks = jax.random.split(key, 7)
    s = 0.1
    return {
        "word_embed": s * jax.random.normal(ks[0], (vocab_size, embed_size), jnp.float32),
        "w_ih":       s * jax.random.normal(ks[1], (4 * hidden_size, embed_size), jnp.float32),
        "w_hh":       s * jax.random.normal(ks[2], (4 * hidden_size, hidden_size), jnp.float32),
        "b_ih":       s * jax.random.normal(ks[3], (4 * hidden_size,), jnp.float32),
        "b_hh":       s * jax.random.normal(ks[4], (4 * hidden_size,), jnp.float32),
        "w_out":      s * jax.random.normal(ks[5], (vocab_size, hidden_size), jnp.float32),
        "b_out":      s * jax.random.normal(ks[6], (vocab_size,), jnp.float32),
    }


if __name__ == "__main__":
    # Deliberately non-aligned sizes to exercise the padding paths.
    embed_size, hidden_size, vocab_size = 40, 48, 1000
    batch, caption_len = 2, 9   # -> T = 1 (image feature) + 8 (words) = 9

    key = jax.random.PRNGKey(0)
    kp, kf, kc = jax.random.split(key, 3)
    params = init_params(kp, embed_size, hidden_size, vocab_size)
    features = jax.random.normal(kf, (batch, embed_size), jnp.float32)
    captions = jax.random.randint(kc, (batch, caption_len), 0, vocab_size,
                                  dtype=jnp.int32)

    out = decoder_rnn_forward(features, captions, params)
    out = jax.block_until_ready(out)

    ref = jax.block_until_ready(_reference_forward(features, captions, params))
    assert out.shape == (batch, caption_len, vocab_size)
    # bf16 MXU operands -> loosen tolerance vs the f32 reference.
    assert jnp.allclose(out, ref, atol=2e-2, rtol=2e-2), "mismatch vs reference"

    print("KERNEL_OK")
</pallas_src>

<mosaic_0001>
module attributes {stable_mosaic.version = 11 : i64} {
  func.func @_matmul_bias_kernel(%arg0: i32, %arg1: i32, %arg2: memref<72x128xbf16, #tpu.memory_space<vmem>>, %arg3: memref<128x512xbf16, #tpu.memory_space<vmem>>, %arg4: memref<1x512xf32, #tpu.memory_space<vmem>>, %arg5: memref<72x512xf32, #tpu.memory_space<vmem>>) attributes {dimension_semantics = [#tpu.dimension_semantics<parallel>, #tpu.dimension_semantics<parallel>], iteration_bounds = array<i64: 1, 1>, scalar_prefetch = 0 : i64, scratch_operands = 0 : i64, tpu.core_type = #tpu.core_type<tc>, window_params = [{transform_indices = @transform_0, window_bounds = array<i64: 72, 128>}, {transform_indices = @transform_1, window_bounds = array<i64: 128, 512>}, {transform_indices = @transform_2, window_bounds = array<i64: 1, 512>}, {transform_indices = @transform_3, window_bounds = array<i64: 72, 512>}]} {
    %c0 = arith.constant 0 : index
    %c0_0 = arith.constant 0 : index
    %0 = vector.load %arg2[%c0, %c0_0] : memref<72x128xbf16, #tpu.memory_space<vmem>>, vector<72x128xbf16>
    %c0_1 = arith.constant 0 : index
    %c0_2 = arith.constant 0 : index
    %1 = vector.load %arg3[%c0_1, %c0_2] : memref<128x512xbf16, #tpu.memory_space<vmem>>, vector<128x512xbf16>
    %cst = arith.constant dense<0.000000e+00> : vector<72x512xf32>
    %2 = tpu.matmul %0, %1, %cst {dimension_numbers = #tpu.dot_dimension_numbers<[1], [0], [0], [1], [0, 0, 1, 1], [], []>} : vector<72x128xbf16>, vector<128x512xbf16>, vector<72x512xf32> -> vector<72x512xf32>
    %c0_3 = arith.constant 0 : index
    %c0_4 = arith.constant 0 : index
    %3 = vector.load %arg4[%c0_3, %c0_4] : memref<1x512xf32, #tpu.memory_space<vmem>>, vector<1x512xf32>
    %4 = vector.broadcast %3 : vector<1x512xf32> to vector<72x512xf32>
    %5 = arith.addf %2, %4 : vector<72x512xf32>
    %c0_5 = arith.constant 0 : index
    %c0_6 = arith.constant 0 : index
    %6 = vector.load %arg5[%c0_5, %c0_6] : memref<72x512xf32, #tpu.memory_space<vmem>>, vector<72x512xf32>
    tpu.vector_store %arg5[%c0_5, %c0_6], %5 {strides = array<i32>} : memref<72x512xf32, #tpu.memory_space<vmem>>, vector<72x512xf32>,
    return
  }
  func.func @transform_0(%arg0: i32, %arg1: i32) -> (i32, i32) {
    %c0_i32 = arith.constant 0 : i32
    %c0_i32_0 = arith.constant 0 : i32
    return %arg1, %c0_i32 : i32, i32
  }
  func.func @transform_1(%arg0: i32, %arg1: i32) -> (i32, i32) {
    %c0_i32 = arith.constant 0 : i32
    %c0_i32_0 = arith.constant 0 : i32
    return %c0_i32, %arg0 : i32, i32
  }
  func.func @transform_2(%arg0: i32, %arg1: i32) -> (i32, i32) {
    %c0_i32 = arith.constant 0 : i32
    %c0_i32_0 = arith.constant 0 : i32
    return %c0_i32, %arg0 : i32, i32
  }
  func.func @transform_3(%arg0: i32, %arg1: i32) -> (i32, i32) {
    %c0_i32 = arith.constant 0 : i32
    return %arg1, %arg0 : i32, i32
  }
}

</mosaic_0001>

<llo_original>
// kernel: tpu_custom_call.1
$region0: #{tpu_custom_call.1}
  #allocation0 [shape = 'u32[]', space=smem, size = 0x4, offset = 0x4, fixed_abs, tag = 'smem constant byte address 0x4 - core index']
  #allocation1 [shape = 'u32[144,128]{1,0:T(1,128)}', space=vmem, size = 0x12000, scoped, tag = 'internal scratch']
  %s0 = inlined_call_operand.hbm [shape: bf16[72,128], index: 0, kind: input, shape index: {}]
  %s1 = inlined_call_operand.hbm [shape: bf16[128,512], index: 1, kind: input, shape index: {}]
  %s2 = inlined_call_operand.vmem [shape: f32[1,512], index: 2, kind: input, shape index: {}]
  %s3 = inlined_call_operand.hbm [shape: f32[72,512], index: 3, kind: output, shape index: {}]
  %s4 = sld [smem:[#allocation0]]
  $region30: #{tpu_custom_call.1} parent=0
    _
  %s6 = ssub.s32 1, %s4
  %s7 = scalar_select 0, %s6, %s4
  $region1: #{tpu_custom_call.1} parent=0
    #allocation2 [shape = 'u8[18432]{0}', space=vmem, size = 0x4800, scoped, tag = 'input window, operand 0, single buffered']
    #allocation3 [shape = 's32[1]{0}', space=sflag, size = 0x4, scoped, tag = 'scoped memory for tpu_custom_call.1']
    #allocation4 [shape = 's32[1]{0}', space=sflag, size = 0x4, scoped, tag = 'scoped memory for tpu_custom_call.1']
    #allocation5 [shape = 'u8[131072]{0}', space=vmem, size = 0x20000, scoped, tag = 'input window, operand 1, single buffered']
    #allocation6 [shape = 's32[1]{0}', space=sflag, size = 0x4, scoped, tag = 'scoped memory for tpu_custom_call.1']
    #allocation7 [shape = 'u8[147456]{0}', space=vmem, size = 0x24000, scoped, tag = 'output window, operand 0, single buffered']
    %8 = vsyncpa [#allocation3], 0
    %9 = vsyncpa [#allocation6], 0
    %10 = vsyncpa [#allocation4], 0
    // Predicated region
    $region2: #{tpu_custom_call.1} parent=1 // pred_check
      _
    $region3: #{tpu_custom_call.1} parent=1 // pred_check_branch
      %12 = sbr.rel (0) target = $region5
    $region4: #{tpu_custom_call.1} parent=1 // pred_region
      %s14 = ssub.s32 576, 576
      %15 = vsyncadd [#allocation3], %s14
      %s16 = sshll.u32 [#allocation2], 4
      %s17 = int_to_ptr.vmem [resolvable:$true] %s16
      %22 = dma.hbm_to_vmem [thread:$0]  %s0, 576, %s17, [#allocation3], 64, 64, 4
    $region5: #{tpu_custom_call.1} parent=1 // pred_fallthru
      _
    // Predicated region
    $region6: #{tpu_custom_call.1} parent=1 // pred_check
      _
    $region7: #{tpu_custom_call.1} parent=1 // pred_check_branch
      %24 = sbr.rel (0) target = $region9
    $region8: #{tpu_custom_call.1} parent=1 // pred_region
      %s26 = ssub.s32 4096, 4096
      %27 = vsyncadd [#allocation6], %s26
      %s28 = sshll.u32 [#allocation5], 4
      %s29 = int_to_ptr.vmem [resolvable:$true] %s28
      %34 = dma.hbm_to_vmem [thread:$0]  %s1, 4096, %s29, [#allocation6], 256, 256, 16
    $region9: #{tpu_custom_call.1} parent=1 // pred_fallthru
      _
    // Predicated region
    $region10: #{tpu_custom_call.1} parent=1 // pred_check
      _
    $region11: #{tpu_custom_call.1} parent=1 // pred_check_branch
      %36 = sbr.rel (0) target = $region13
    $region12: #{tpu_custom_call.1} parent=1 // pred_region
      _
    $region13: #{tpu_custom_call.1} parent=1 // pred_fallthru
      _
    // Predicated region
    $region14: #{tpu_custom_call.1} parent=1 // pred_check
      _
    $region15: #{tpu_custom_call.1} parent=1 // pred_check_branch
      %38 = sbr.rel (0) target = $region17
    $region16: #{tpu_custom_call.1} parent=1 // pred_region
      %39 = dma.done [#allocation3], 576
    $region17: #{tpu_custom_call.1} parent=1 // pred_fallthru
      _
    // Predicated region
    $region18: #{tpu_custom_call.1} parent=1 // pred_check
      _
    $region19: #{tpu_custom_call.1} parent=1 // pred_check_branch
      %41 = sbr.rel (0) target = $region21
    $region20: #{tpu_custom_call.1} parent=1 // pred_region
      %42 = dma.done [#allocation6], 4096
    $region21: #{tpu_custom_call.1} parent=1 // pred_fallthru
      _
    %v44 = vld [vmem:[#allocation2] sm:$0xf]
    %v45 = vld [vmem:[#allocation2 + $0x4] sm:$0xf]
    %v46 = vld [vmem:[#allocation2 + $0x8] sm:$0xf]
    %v47 = vld [vmem:[#allocation2 + $0xc] sm:$0xf]
    %v48 = vld [vmem:[#allocation2 + $0x10] sm:$0xf]
    %v49 = vld [vmem:[#allocation2 + $0x14] sm:$0xf]
    %v50 = vld [vmem:[#allocation2 + $0x18] sm:$0xf]
    %v51 = vld [vmem:[#allocation2 + $0x1c] sm:$0xf]
    %v52 = vld [vmem:[#allocation2 + $0x20] sm:$0xf]
    %v53 = vld [vmem:[#allocation5] sm:$0xff]
    %v54 = vld [vmem:[#allocation5 + $0x8] sm:$0xff]
    %v55 = vld [vmem:[#allocation5 + $0x10] sm:$0xff]
    %v56 = vld [vmem:[#allocation5 + $0x18] sm:$0xff]
    %v57 = vld [vmem:[#allocation5 + $0x20] sm:$0xff]
    %v58 = vld [vmem:[#allocation5 + $0x28] sm:$0xff]
    %v59 = vld [vmem:[#allocation5 + $0x30] sm:$0xff]
    %v60 = vld [vmem:[#allocation5 + $0x38] sm:$0xff]
    %v61 = vld [vmem:[#allocation5 + $0x40] sm:$0xff]
    %v62 = vld [vmem:[#allocation5 + $0x48] sm:$0xff]
    %v63 = vld [vmem:[#allocation5 + $0x50] sm:$0xff]
    %v64 = vld [vmem:[#allocation5 + $0x58] sm:$0xff]
    %v65 = vld [vmem:[#allocation5 + $0x60] sm:$0xff]
    %v66 = vld [vmem:[#allocation5 + $0x68] sm:$0xff]
    %v67 = vld [vmem:[#allocation5 + $0x70] sm:$0xff]
    %v68 = vld [vmem:[#allocation5 + $0x78] sm:$0xff]
    %v69 = vld [vmem:[#allocation5 + $0x80] sm:$0xff]
    %v70 = vld [vmem:[#allocation5 + $0x88] sm:$0xff]
    %v71 = vld [vmem:[#allocation5 + $0x90] sm:$0xff]
    %v72 = vld [vmem:[#allocation5 + $0x98] sm:$0xff]
    %v73 = vld [vmem:[#allocation5 + $0xa0] sm:$0xff]
    %v74 = vld [vmem:[#allocation5 + $0xa8] sm:$0xff]
    %v75 = vld [vmem:[#allocation5 + $0xb0] sm:$0xff]
    %v76 = vld [vmem:[#allocation5 + $0xb8] sm:$0xff]
    %v77 = vld [vmem:[#allocation5 + $0xc0] sm:$0xff]
    %v78 = vld [vmem:[#allocation5 + $0xc8] sm:$0xff]
    %v79 = vld [vmem:[#allocation5 + $0xd0] sm:$0xff]
    %v80 = vld [vmem:[#allocation5 + $0xd8] sm:$0xff]
    %v81 = vld [vmem:[#allocation5 + $0xe0] sm:$0xff]
    %v82 = vld [vmem:[#allocation5 + $0xe8] sm:$0xff]
    %v83 = vld [vmem:[#allocation5 + $0xf0] sm:$0xff]
    %v84 = vld [vmem:[#allocation5 + $0xf8] sm:$0xff]
    %v85 = vld [vmem:[%s2] sm:$0xf]
    %v87 = vlaneseq
    %v88 = vshrl.u32 %v87, 7
    %v89 = vsub.s32 0, %v88
    %v90 = vrot.slane %v85, %v89
    %v91 = vlaneseq
    %v92 = vshrl.u32 %v91, 7
    %v93 = vsub.s32 1, %v92
    %v94 = vrot.slane %v85, %v93
    %v95 = vlaneseq
    %v96 = vshrl.u32 %v95, 7
    %v97 = vsub.s32 2, %v96
    %v98 = vrot.slane %v85, %v97
    %v99 = vlaneseq
    %v100 = vshrl.u32 %v99, 7
    %v101 = vsub.s32 3, %v100
    %v102 = vrot.slane %v85, %v101
    %v116 = vunpack.c.l.b16 %v44
    %v117 = vunpack.c.l.b16 %v45
    %v118 = vunpack.c.l.b16 %v46
    %v119 = vunpack.c.l.b16 %v47
    %v120 = vunpack.c.l.b16 %v48
    %v121 = vunpack.c.l.b16 %v49
    %v122 = vunpack.c.l.b16 %v50
    %v123 = vunpack.c.l.b16 %v51
    %v124 = vunpack.c.l.b16 %v52
    %v125 = vpack.c.b16 %v117, %v116
    %v126 = vpack.c.b16 %v119, %v118
    %v127 = vpack.c.b16 %v121, %v120
    %v128 = vpack.c.b16 %v123, %v122
    %v129 = vpack.c.b16 %v124, %v124
    %v167 = vunpack.c.l.b16 %v53
    %v168 = vunpack.c.h.b16 %v53
    %v169 = vunpack.c.l.b16 %v54
    %v170 = vunpack.c.h.b16 %v54
    %v171 = vunpack.c.l.b16 %v55
    %v172 = vunpack.c.h.b16 %v55
    %v173 = vunpack.c.l.b16 %v56
    %v174 = vunpack.c.h.b16 %v56
    %v175 = vunpack.c.l.b16 %v57
    %v176 = vunpack.c.h.b16 %v57
    %v177 = vunpack.c.l.b16 %v58
    %v178 = vunpack.c.h.b16 %v58
    %v179 = vunpack.c.l.b16 %v59
    %v180 = vunpack.c.h.b16 %v59
    %v181 = vunpack.c.l.b16 %v60
    %v182 = vunpack.c.h.b16 %v60
    %v183 = vunpack.c.l.b16 %v61
    %v184 = vunpack.c.h.b16 %v61
    %v185 = vunpack.c.l.b16 %v62
    %v186 = vunpack.c.h.b16 %v62
    %v187 = vunpack.c.l.b16 %v63
    %v188 = vunpack.c.h.b16 %v63
    %v189 = vunpack.c.l.b16 %v64
    %v190 = vunpack.c.h.b16 %v64
    %v191 = vunpack.c.l.b16 %v65
    %v192 = vunpack.c.h.b16 %v65
    %v193 = vunpack.c.l.b16 %v66
    %v194 = vunpack.c.h.b16 %v66
    %v195 = vunpack.c.l.b16 %v67
    %v196 = vunpack.c.h.b16 %v67
    %v197 = vunpack.c.l.b16 %v68
    %v198 = vunpack.c.h.b16 %v68
    %v199 = vunpack.c.l.b16 %v69
    %v200 = vunpack.c.h.b16 %v69
    %v201 = vunpack.c.l.b16 %v70
    %v202 = vunpack.c.h.b16 %v70
    %v203 = vunpack.c.l.b16 %v71
    %v204 = vunpack.c.h.b16 %v71
    %v205 = vunpack.c.l.b16 %v72
    %v206 = vunpack.c.h.b16 %v72
    %v207 = vunpack.c.l.b16 %v73
    %v208 = vunpack.c.h.b16 %v73
    %v209 = vunpack.c.l.b16 %v74
    %v210 = vunpack.c.h.b16 %v74
    %v211 = vunpack.c.l.b16 %v75
    %v212 = vunpack.c.h.b16 %v75
    %v213 = vunpack.c.l.b16 %v76
    %v214 = vunpack.c.h.b16 %v76
    %v215 = vunpack.c.l.b16 %v77
    %v216 = vunpack.c.h.b16 %v77
    %v217 = vunpack.c.l.b16 %v78
    %v218 = vunpack.c.h.b16 %v78
    %v219 = vunpack.c.l.b16 %v79
    %v220 = vunpack.c.h.b16 %v79
    %v221 = vunpack.c.l.b16 %v80
    %v222 = vunpack.c.h.b16 %v80
    %v223 = vunpack.c.l.b16 %v81
    %v224 = vunpack.c.h.b16 %v81
    %v225 = vunpack.c.l.b16 %v82
    %v226 = vunpack.c.h.b16 %v82
    %v227 = vunpack.c.l.b16 %v83
    %v228 = vunpack.c.h.b16 %v83
    %v229 = vunpack.c.l.b16 %v84
    %v230 = vunpack.c.h.b16 %v84
    %v231 = vpack.c.b16 %v171, %v167
    %v232 = vpack.c.b16 %v172, %v168
    %v233 = vpack.c.b16 %v173, %v169
    %v234 = vpack.c.b16 %v174, %v170
    %v235 = vpack.c.b16 %v179, %v175
    %v236 = vpack.c.b16 %v180, %v176
    %v237 = vpack.c.b16 %v181, %v177
    %v238 = vpack.c.b16 %v182, %v178
    %v239 = vpack.c.b16 %v187, %v183
    %v240 = vpack.c.b16 %v188, %v184
    %v241 = vpack.c.b16 %v189, %v185
    %v242 = vpack.c.b16 %v190, %v186
    %v243 = vpack.c.b16 %v195, %v191
    %v244 = vpack.c.b16 %v196, %v192
    %v245 = vpack.c.b16 %v197, %v193
    %v246 = vpack.c.b16 %v198, %v194
    %v247 = vpack.c.b16 %v203, %v199
    %v248 = vpack.c.b16 %v204, %v200
    %v249 = vpack.c.b16 %v205, %v201
    %v250 = vpack.c.b16 %v206, %v202
    %v251 = vpack.c.b16 %v211, %v207
    %v252 = vpack.c.b16 %v212, %v208
    %v253 = vpack.c.b16 %v213, %v209
    %v254 = vpack.c.b16 %v214, %v210
    %v255 = vpack.c.b16 %v219, %v215
    %v256 = vpack.c.b16 %v220, %v216
    %v257 = vpack.c.b16 %v221, %v217
    %v258 = vpack.c.b16 %v222, %v218
    %v259 = vpack.c.b16 %v227, %v223
    %v260 = vpack.c.b16 %v228, %v224
    %v261 = vpack.c.b16 %v229, %v225
    %v262 = vpack.c.b16 %v230, %v226
    %295 = vmatprep.subr.bf16.mxu0 %v232
    %296 = vmatpush1.bf16.msra.mxu0 %v231
    %297 = vmatprep.subr.bf16.mxu0 %v236
    %298 = vmatpush1.bf16.msra.mxu0 %v235
    %299 = vmatprep.subr.bf16.mxu0 %v240
    %300 = vmatpush1.bf16.msra.mxu0 %v239
    %301 = vmatprep.subr.bf16.mxu0 %v244
    %302 = vmatpush1.bf16.msra.mxu0 %v243
    %303 = vmatprep.subr.bf16.mxu0 %v248
    %304 = vmatpush1.bf16.msra.mxu0 %v247
    %305 = vmatprep.subr.bf16.mxu0 %v252
    %306 = vmatpush1.bf16.msra.mxu0 %v251
    %307 = vmatprep.subr.bf16.mxu0 %v256
    %308 = vmatpush1.bf16.msra.mxu0 %v255
    %309 = vmatprep.subr.bf16.mxu0 %v260
    %310 = vmatpush1.bf16.msra.mxu0 %v259
    %311 = vmatprep.subr.bf16.mxu0 0
    %312 = vmatpush1.bf16.msra.mxu0 0
    %313 = vmatprep.subr.bf16.mxu0 0
    %314 = vmatpush1.bf16.msra.mxu0 0
    %315 = vmatprep.subr.bf16.mxu0 0
    %316 = vmatpush1.bf16.msra.mxu0 0
    %317 = vmatprep.subr.bf16.mxu0 0
    %318 = vmatpush1.bf16.msra.mxu0 0
    %319 = vmatprep.subr.bf16.mxu0 0
    %320 = vmatpush1.bf16.msra.mxu0 0
    %321 = vmatprep.subr.bf16.mxu0 0
    %322 = vmatpush1.bf16.msra.mxu0 0
    %323 = vmatprep.subr.bf16.mxu0 0
    %324 = vmatpush1.bf16.msra.mxu0 0
    %325 = vmatprep.subr.bf16.mxu0 0
    %326 = vmatpush1.bf16.msra.mxu0 0
    %327 = vmatprep.mubr.bf16.mxu0 0
    %328 = vmatmul.mubr.bf16.gmra.mrb[0].mxu0 %v125
    %v329 = vpop.f32.mrb[0].mxu0
    %v330 = vadd.f32 %v90, %v329
    %v331 = vpop.f32.mrb[0].mxu0
    %v332 = vadd.f32 %v94, %v331
    %v333 = vpop.f32.mrb[0].mxu0
    %v334 = vadd.f32 %v90, %v333
    %v335 = vpop.f32.mrb[0].mxu0
    %v336 = vadd.f32 %v94, %v335
    %337 = vmatprep.mubr.bf16.mxu0 0
    %338 = vmatmul.mubr.bf16.gmra.mrb[0].mxu0 %v126
    %v339 = vpop.f32.mrb[0].mxu0
    %v340 = vadd.f32 %v90, %v339
    %v341 = vpop.f32.mrb[0].mxu0
    %v342 = vadd.f32 %v94, %v341
    %v343 = vpop.f32.mrb[0].mxu0
    %v344 = vadd.f32 %v90, %v343
    %v345 = vpop.f32.mrb[0].mxu0
    %v346 = vadd.f32 %v94, %v345
    %347 = vmatprep.mubr.bf16.mxu0 0
    %348 = vmatmul.mubr.bf16.gmra.mrb[0].mxu0 %v127
    %v349 = vpop.f32.mrb[0].mxu0
    %v350 = vadd.f32 %v90, %v349
    %v351 = vpop.f32.mrb[0].mxu0
    %v352 = vadd.f32 %v94, %v351
    %v353 = vpop.f32.mrb[0].mxu0
    %v354 = vadd.f32 %v90, %v353
    %v355 = vpop.f32.mrb[0].mxu0
    %v356 = vadd.f32 %v94, %v355
    %357 = vmatprep.mubr.bf16.mxu0 0
    %358 = vmatmul.mubr.bf16.gmra.mrb[0].mxu0 %v128
    %v359 = vpop.f32.mrb[0].mxu0
    %v360 = vadd.f32 %v90, %v359
    %v361 = vpop.f32.mrb[0].mxu0
    %v362 = vadd.f32 %v94, %v361
    %v363 = vpop.f32.mrb[0].mxu0
    %v364 = vadd.f32 %v90, %v363
    %v365 = vpop.f32.mrb[0].mxu0
    %v366 = vadd.f32 %v94, %v365
    %367 = vmatprep.mubr.bf16.mxu0 0
    %368 = vmatmul.mubr.bf16.gmra.mrb[0].mxu0 %v129
    %v369 = vpop.f32.mrb[0].mxu0
    %v370 = vadd.f32 %v90, %v369
    %v371 = vpop.f32.mrb[0].mxu0
    %v372 = vadd.f32 %v94, %v371
    %v373 = vpop.f32.mrb[0].mxu0
    %v374 = vpop.f32.mrb[0].mxu0
    %375 = vdwg.mxu0
    %376 = vmatprep.subr.bf16.mxu0 %v234
    %377 = vmatpush1.bf16.msra.mxu0 %v233
    %378 = vmatprep.subr.bf16.mxu0 %v238
    %379 = vmatpush1.bf16.msra.mxu0 %v237
    %380 = vmatprep.subr.bf16.mxu0 %v242
    %381 = vmatpush1.bf16.msra.mxu0 %v241
    %382 = vmatprep.subr.bf16.mxu0 %v246
    %383 = vmatpush1.bf16.msra.mxu0 %v245
    %384 = vmatprep.subr.bf16.mxu0 %v250
    %385 = vmatpush1.bf16.msra.mxu0 %v249
    %386 = vmatprep.subr.bf16.mxu0 %v254
    %387 = vmatpush1.bf16.msra.mxu0 %v253
    %388 = vmatprep.subr.bf16.mxu0 %v258
    %389 = vmatpush1.bf16.msra.mxu0 %v257
    %390 = vmatprep.subr.bf16.mxu0 %v262
    %391 = vmatpush1.bf16.msra.mxu0 %v261
    %392 = vmatprep.subr.bf16.mxu0 0
    %393 = vmatpush1.bf16.msra.mxu0 0
    %394 = vmatprep.subr.bf16.mxu0 0
    %395 = vmatpush1.bf16.msra.mxu0 0
    %396 = vmatprep.subr.bf16.mxu0 0
    %397 = vmatpush1.bf16.msra.mxu0 0
    %398 = vmatprep.subr.bf16.mxu0 0
    %399 = vmatpush1.bf16.msra.mxu0 0
    %400 = vmatprep.subr.bf16.mxu0 0
    %401 = vmatpush1.bf16.msra.mxu0 0
    %402 = vmatprep.subr.bf16.mxu0 0
    %403 = vmatpush1.bf16.msra.mxu0 0
    %404 = vmatprep.subr.bf16.mxu0 0
    %405 = vmatpush1.bf16.msra.mxu0 0
    %406 = vmatprep.subr.bf16.mxu0 0
    %407 = vmatpush1.bf16.msra.mxu0 0
    %408 = vmatprep.mubr.bf16.mxu0 0
    %409 = vmatmul.mubr.bf16.gmra.mrb[0].mxu0 %v125
    %v410 = vpop.f32.mrb[0].mxu0
    %v411 = vadd.f32 %v98, %v410
    %v412 = vpop.f32.mrb[0].mxu0
    %v413 = vadd.f32 %v102, %v412
    %v414 = vpop.f32.mrb[0].mxu0
    %v415 = vadd.f32 %v98, %v414
    %v416 = vpop.f32.mrb[0].mxu0
    %v417 = vadd.f32 %v102, %v416
    %418 = vmatprep.mubr.bf16.mxu0 0
    %419 = vmatmul.mubr.bf16.gmra.mrb[0].mxu0 %v126
    %v420 = vpop.f32.mrb[0].mxu0
    %v421 = vadd.f32 %v98, %v420
    %v422 = vpop.f32.mrb[0].mxu0
    %v423 = vadd.f32 %v102, %v422
    %v424 = vpop.f32.mrb[0].mxu0
    %v425 = vadd.f32 %v98, %v424
    %v426 = vpop.f32.mrb[0].mxu0
    %v427 = vadd.f32 %v102, %v426
    %428 = vmatprep.mubr.bf16.mxu0 0
    %429 = vmatmul.mubr.bf16.gmra.mrb[0].mxu0 %v127
    %v430 = vpop.f32.mrb[0].mxu0
    %v431 = vadd.f32 %v98, %v430
    %v432 = vpop.f32.mrb[0].mxu0
    %v433 = vadd.f32 %v102, %v432
    %v434 = vpop.f32.mrb[0].mxu0
    %v435 = vadd.f32 %v98, %v434
    %v436 = vpop.f32.mrb[0].mxu0
    %v437 = vadd.f32 %v102, %v436
    %438 = vmatprep.mubr.bf16.mxu0 0
    %439 = vmatmul.mubr.bf16.gmra.mrb[0].mxu0 %v128
    %v440 = vpop.f32.mrb[0].mxu0
    %v441 = vadd.f32 %v98, %v440
    %v442 = vpop.f32.mrb[0].mxu0
    %v443 = vadd.f32 %v102, %v442
    %v444 = vpop.f32.mrb[0].mxu0
    %v445 = vadd.f32 %v98, %v444
    %v446 = vpop.f32.mrb[0].mxu0
    %v447 = vadd.f32 %v102, %v446
    %448 = vmatprep.mubr.bf16.mxu0 0
    %449 = vmatmul.mubr.bf16.gmra.mrb[0].mxu0 %v129
    %v450 = vpop.f32.mrb[0].mxu0
    %v451 = vadd.f32 %v98, %v450
    %v452 = vpop.f32.mrb[0].mxu0
    %v453 = vadd.f32 %v102, %v452
    %v454 = vpop.f32.mrb[0].mxu0
    %v455 = vpop.f32.mrb[0].mxu0
    %456 = vdwg.mxu0
    %457 = vst [vmem:[#allocation7] sm:$0xff] %v330
    %458 = vst [vmem:[#allocation7 + $0x8] sm:$0xff] %v332
    %459 = vst [vmem:[#allocation7 + $0x10] sm:$0xff] %v411
    %460 = vst [vmem:[#allocation7 + $0x18] sm:$0xff] %v413
    %461 = vst [vmem:[#allocation7 + $0x20] sm:$0xff] %v334
    %462 = vst [vmem:[#allocation7 + $0x28] sm:$0xff] %v336
    %463 = vst [vmem:[#allocation7 + $0x30] sm:$0xff] %v415
    %464 = vst [vmem:[#allocation7 + $0x38] sm:$0xff] %v417
    %465 = vst [vmem:[#allocation7 + $0x40] sm:$0xff] %v340
    %466 = vst [vmem:[#allocation7 + $0x48] sm:$0xff] %v342
    %467 = vst [vmem:[#allocation7 + $0x50] sm:$0xff] %v421
    %468 = vst [vmem:[#allocation7 + $0x58] sm:$0xff] %v423
    %469 = vst [vmem:[#allocation7 + $0x60] sm:$0xff] %v344
    %470 = vst [vmem:[#allocation7 + $0x68] sm:$0xff] %v346
    %471 = vst [vmem:[#allocation7 + $0x70] sm:$0xff] %v425
    %472 = vst [vmem:[#allocation7 + $0x78] sm:$0xff] %v427
    %473 = vst [vmem:[#allocation7 + $0x80] sm:$0xff] %v350
    %474 = vst [vmem:[#allocation7 + $0x88] sm:$0xff] %v352
    %475 = vst [vmem:[#allocation7 + $0x90] sm:$0xff] %v431
    %476 = vst [vmem:[#allocation7 + $0x98] sm:$0xff] %v433
    %477 = vst [vmem:[#allocation7 + $0xa0] sm:$0xff] %v354
    %478 = vst [vmem:[#allocation7 + $0xa8] sm:$0xff] %v356
    %479 = vst [vmem:[#allocation7 + $0xb0] sm:$0xff] %v435
    %480 = vst [vmem:[#allocation7 + $0xb8] sm:$0xff] %v437
    %481 = vst [vmem:[#allocation7 + $0xc0] sm:$0xff] %v360
    %482 = vst [vmem:[#allocation7 + $0xc8] sm:$0xff] %v362
    %483 = vst [vmem:[#allocation7 + $0xd0] sm:$0xff] %v441
    %484 = vst [vmem:[#allocation7 + $0xd8] sm:$0xff] %v443
    %485 = vst [vmem:[#allocation7 + $0xe0] sm:$0xff] %v364
    %486 = vst [vmem:[#allocation7 + $0xe8] sm:$0xff] %v366
    %487 = vst [vmem:[#allocation7 + $0xf0] sm:$0xff] %v445
    %488 = vst [vmem:[#allocation7 + $0xf8] sm:$0xff] %v447
    %489 = vst [vmem:[#allocation7 + $0x100] sm:$0xff] %v370
    %490 = vst [vmem:[#allocation7 + $0x108] sm:$0xff] %v372
    %491 = vst [vmem:[#allocation7 + $0x110] sm:$0xff] %v451
    %492 = vst [vmem:[#allocation7 + $0x118] sm:$0xff] %v453
    // Predicated region
    $region22: #{tpu_custom_call.1} parent=1 // pred_check
      _
    $region23: #{tpu_custom_call.1} parent=1 // pred_check_branch
      %494 = sbr.rel (0) target = $region25
    $region24: #{tpu_custom_call.1} parent=1 // pred_region
      %s496 = ssub.s32 4608, 4608
      %497 = vsyncadd [#allocation4], %s496
      %s498 = sshll.u32 [#allocation7], 4
      %s499 = int_to_ptr.vmem [resolvable:$true] %s498
      %504 = dma.vmem_to_hbm [thread:$0]  %s499, 4608, %s3, [#allocation4], 512, 512, 32
    $region25: #{tpu_custom_call.1} parent=1 // pred_fallthru
      _
    // Predicated region
    $region26: #{tpu_custom_call.1} parent=1 // pred_check
      _
    $region27: #{tpu_custom_call.1} parent=1 // pred_check_branch
      %506 = sbr.rel (0) target = $region29
    $region28: #{tpu_custom_call.1} parent=1 // pred_region
      %507 = dma.done [#allocation4], 4608
    $region29: #{tpu_custom_call.1} parent=1 // pred_fallthru
      _
    %508 = vsyncpa [#allocation3], 1
    %509 = vsyncpa [#allocation6], 1
    %510 = vsyncpa [#allocation4], 1

</llo_original>
